<compile_context>
chip_gen: v7x
topology: tpu7x:2x2x1
jax: 0.10.0
libtpu: 0.0.40
codegen_flags: <defaults>
</compile_context>

<pallas_src>
import functools

import jax
import jax.numpy as jnp
from jax import lax
from jax.experimental import pallas as pl
from jax.experimental.pallas import tpu as pltpu


def _msa_kernel(x_ref, qw_ref, qb_ref, kwbd_ref, kb_ref, out_ref, *attn_refs,
                num_groups, head_dim, block_j, compute_dtype, approx_recip):
    """One (batch, j-tile) per grid step; the group dim is fused into the MXU rows.

    x_ref    : (1, N, C)        input features (q operand, k operand, values)
    qw_ref   : (C, D)           q_proj weight, pre-transposed & pre-scaled by scale/tau
    qb_ref   : (1, D)           q_proj bias, pre-scaled by scale/tau (f32)
    kwbd_ref : (C, C)           block-diagonal grouped 1x1-conv weight
    kb_ref   : (1, C)           grouped conv bias (f32)
    out_ref  : (1, TJ, C)       lane-dense context output
    attn_refs: ((1, G, TJ, N),) attention maps (optional)
    """
    G, D, TJ = num_groups, head_dim, block_j
    N = x_ref.shape[1]
    cdt = compute_dtype

    x_full = x_ref[0]                                             # (N, C)

    # --- q projection (scale and 1/tau pre-folded into weight & bias) -------
    q = jnp.dot(x_full, qw_ref[...],
                preferred_element_type=jnp.float32) + qb_ref[...]  # (N, D) f32
    q = q.astype(cdt)

    # --- k projection: ONE block-diagonal matmul, contraction K = C ---------
    if TJ == N:
        xj = x_full
    else:
        j0 = pl.multiple_of(pl.program_id(1) * TJ, TJ)
        xj = x_ref[0, pl.ds(j0, TJ), :]                           # (TJ, C)
    k = jnp.dot(xj, kwbd_ref[...],
                preferred_element_type=jnp.float32) + kb_ref[...]  # (TJ, C) f32
    k = k.astype(cdt)

    # Regroup k (TJ, C) -> (G*TJ, D): rows ordered [group, row-within-tile].
    kg = jnp.concatenate([k[:, g * D:(g + 1) * D] for g in range(G)], axis=0)

    # --- scores: ONE fused MXU call (k . q^T), contraction over D -----------
    scores = lax.dot_general(kg, q, (((1,), (1,)), ((), ())),
                             preferred_element_type=jnp.float32)   # (G*TJ, N)

    # --- numerically stable softmax over the query index i (last dim) -------
    scores = scores - jnp.max(scores, axis=-1, keepdims=True)
    e = jnp.exp(scores)
    inv = pl.reciprocal(jnp.sum(e, axis=-1, keepdims=True), approx=approx_recip)
    attn = e * inv                                                 # (G*TJ, N) f32

    # --- context: ONE fused MXU call against the lane-dense value matrix ----
    ctx_all = jnp.dot(attn.astype(cdt), x_full,
                      preferred_element_type=jnp.float32)          # (G*TJ, C)

    # Block-select the per-group diagonal and assemble lane-dense (TJ, C):
    #   out[j, g*D + d] = ctx_all[g*TJ + j, g*D + d]
    out = jnp.concatenate(
        [ctx_all[g * TJ:(g + 1) * TJ, g * D:(g + 1) * D] for g in range(G)],
        axis=1)                                                    # (TJ, C)
    out_ref[0] = out.astype(out_ref.dtype)

    if attn_refs:
        attn_refs[0][0] = attn.reshape(G, TJ, N).astype(attn_refs[0].dtype)


def _pick_block_j(n, b):
    """Default j-tile: whole N when small, else a multiple-of-8 divisor <= cap."""
    cap = 256
    if b < 2:                      # give the second TensorCore work when B == 1
        cap = min(cap, max(8, n // 2))
    if n <= cap:
        return n
    for t in (256, 128, 64, 32, 16, 8):
        if t <= cap and n % t == 0:
            return t
    return n


def multi_segment_attention(x, q_w, q_b, k_w, k_b, *, num_groups, tau=1.0,
                            block_j=None, compute_dtype=None, attn_dtype=None,
                            return_attn=True, approx_softmax_recip=True,
                            vmem_limit_bytes=None):
    """Pallas MSA forward (attn_mask=None path).

    Args:
      x:   (B, N, C)
      q_w: (D, C), q_b: (D,)   -- nn.Linear(embed_dim, head_dim)
      k_w: (C, D), k_b: (C,)   -- nn.Conv2d(C, C, 1, groups=G) weight squeezed
      compute_dtype: matmul input dtype (e.g. jnp.bfloat16 on v6e/v7x).
                     Defaults to x.dtype; accumulation is always f32.
      attn_dtype:    dtype of the returned attention map (defaults to x.dtype).
    Returns:
      out  : (B, N, C)
      attn : (B, G, N, N)   (only when return_attn=True)
    """
    B, N, C = x.shape
    G = num_groups
    if C % G != 0:
        raise ValueError(f"embed_dim ({C}) must be divisible by num_groups ({G})")
    D = C // G
    scale = 1.0 / (D ** 0.5)
    s = scale / float(tau)

    cdt = jnp.dtype(compute_dtype) if compute_dtype is not None else x.dtype
    out_dt = x.dtype
    attn_dt = jnp.dtype(attn_dtype) if attn_dtype is not None else x.dtype

    # Fold attention scale and softmax temperature into the q projection
    # (free at trace time; removes two VPU passes over the (G,N,N) scores).
    qw_t = (q_w.astype(jnp.float32) * s).T.astype(cdt)             # (C, D)
    qb_r = (q_b.astype(jnp.float32) * s).reshape(1, D)             # (1, D) f32

    # Grouped 1x1-conv weight -> block-diagonal (C, C) matrix (in->out layout)
    # so the kernel runs a single K=C matmul for the k projection.
    kw_g = k_w.astype(jnp.float32).reshape(G, D, D)                # (g, out, in)
    kw_bd = jnp.zeros((C, C), jnp.float32)
    for g in range(G):
        kw_bd = kw_bd.at[g * D:(g + 1) * D, g * D:(g + 1) * D].set(kw_g[g].T)
    kw_bd = kw_bd.astype(cdt)
    kb_r = k_b.astype(jnp.float32).reshape(1, C)                   # (1, C) f32

    x_c = x.astype(cdt)

    if block_j is None:
        block_j = _pick_block_j(N, B)
    if N % block_j != 0:
        raise ValueError(f"block_j ({block_j}) must divide N ({N})")
    n_j = N // block_j

    kernel = functools.partial(
        _msa_kernel, num_groups=G, head_dim=D, block_j=block_j,
        compute_dtype=cdt, approx_recip=approx_softmax_recip)

    out_shapes = [jax.ShapeDtypeStruct((B, N, C), out_dt)]
    out_specs = [pl.BlockSpec((1, block_j, C), lambda b, j: (b, j, 0))]
    if return_attn:
        out_shapes.append(jax.ShapeDtypeStruct((B, G, N, N), attn_dt))
        out_specs.append(pl.BlockSpec((1, G, block_j, N), lambda b, j: (b, 0, j, 0)))

    # Auto-raise the scoped-VMEM limit only when the per-step working set is
    # large (big N); small problems keep the compiler default.
    if vmem_limit_bytes is None:
        isz = jnp.dtype(cdt).itemsize
        est = (2 * (N * C * isz + C * C * isz + C * D * isz
                    + block_j * C * jnp.dtype(out_dt).itemsize
                    + G * block_j * N * jnp.dtype(attn_dt).itemsize)
               + 4 * (3 * G * block_j * N + G * block_j * C + 2 * N * C))
        if est > 12 * (1 << 20):
            vmem_limit_bytes = int(min(max(2 * est, 32 << 20), 100 << 20))

    cparams = dict(dimension_semantics=("parallel", "parallel"))
    if vmem_limit_bytes is not None:
        cparams["vmem_limit_bytes"] = int(vmem_limit_bytes)

    results = pl.pallas_call(
        kernel,
        out_shape=tuple(out_shapes),
        grid_spec=pltpu.PrefetchScalarGridSpec(
            num_scalar_prefetch=0,
            grid=(B, n_j),
            in_specs=[
                pl.BlockSpec((1, N, C), lambda b, j: (b, 0, 0)),   # x (fetched once per b)
                pl.BlockSpec((C, D), lambda b, j: (0, 0)),          # qw
                pl.BlockSpec((1, D), lambda b, j: (0, 0)),          # qb
                pl.BlockSpec((C, C), lambda b, j: (0, 0)),          # kw (block-diag)
                pl.BlockSpec((1, C), lambda b, j: (0, 0)),          # kb
            ],
            out_specs=tuple(out_specs),
        ),
        compiler_params=pltpu.CompilerParams(**cparams),
    )(x_c, qw_t, qb_r, kw_bd, kb_r)

    if return_attn:
        out, attn = results
        return out, attn
    return results[0]


def _reference(x, q_w, q_b, k_w, k_b, num_groups, tau=1.0):
    """Pure-JAX reference mirroring the PyTorch forward (mask=None path)."""
    B, N, C = x.shape
    D = C // num_groups
    scale = 1.0 / (D ** 0.5)
    k = jnp.zeros((B, N, C), jnp.float32)
    for g in range(num_groups):
        lo, hi = g * D, (g + 1) * D
        k = k.at[:, :, lo:hi].set(
            jnp.einsum('bnd,cd->bnc', x[:, :, lo:hi], k_w[lo:hi]) + k_b[lo:hi])
    q = jnp.einsum('bnc,dc->bnd', x, q_w) + q_b                       # (B, N, D)
    v = x.reshape(B, N, num_groups, D).transpose(0, 2, 1, 3)          # (B, G, N, D)
    kg = k.reshape(B, N, num_groups, D).transpose(0, 2, 1, 3)         # (B, G, N, D)
    k_flat = kg.reshape(B, num_groups * N, D).transpose(0, 2, 1)      # (B, D, G*N)
    aw = jnp.einsum('bnd,bdm->bnm', q, k_flat) * scale                # (B, N, G*N)
    aw = aw.transpose(0, 2, 1)                                        # (B, G*N, N)
    aw = jax.nn.softmax(aw / tau, axis=-1)
    aw = aw.reshape(B, num_groups, N, N)
    ctx = jnp.einsum('bgji,bgid->bgjd', aw, v)                        # (B, G, N, D)
    ctx = ctx.transpose(0, 2, 1, 3).reshape(B, N, C)
    return ctx, aw


if __name__ == "__main__":
    B, N, C, G = 2, 8, 32, 4   # batch, num priors, embed_dim, num_groups
    D = C // G
    tau = 2.0

    key = jax.random.PRNGKey(0)
    kx, kqw, kqb, kkw, kkb = jax.random.split(key, 5)
    x = jax.random.normal(kx, (B, N, C), jnp.float32)
    q_w = jax.random.normal(kqw, (D, C), jnp.float32) * 0.1
    q_b = jax.random.normal(kqb, (D,), jnp.float32) * 0.1
    k_w = jax.random.normal(kkw, (C, D), jnp.float32) * 0.1   # conv (C, D, 1, 1) squeezed
    k_b = jax.random.normal(kkb, (C,), jnp.float32) * 0.1

    out, attn = multi_segment_attention(x, q_w, q_b, k_w, k_b,
                                        num_groups=G, tau=tau)
    out = jax.block_until_ready(out)
    attn = jax.block_until_ready(attn)

    ref_out, ref_attn = _reference(x, q_w, q_b, k_w, k_b, G, tau=tau)
    assert out.shape == (B, N, C) and attn.shape == (B, G, N, N)
    # approx EUP reciprocal in the softmax -> slightly looser tolerance.
    assert jnp.allclose(out, ref_out, atol=5e-3, rtol=5e-3)
    assert jnp.allclose(attn, ref_attn, atol=5e-3, rtol=5e-3)

    # Optional-output path (attn store skipped entirely).
    out_only = multi_segment_attention(x, q_w, q_b, k_w, k_b,
                                       num_groups=G, tau=tau, return_attn=False)
    out_only = jax.block_until_ready(out_only)
    assert jnp.allclose(out_only, ref_out, atol=5e-3, rtol=5e-3)

    print("KERNEL_OK")
</pallas_src>

<mosaic_0001>
module attributes {stable_mosaic.version = 11 : i64} {
  func.func @_msa_kernel(%arg0: i32, %arg1: i32, %arg2: memref<1x8x32xf32, #tpu.memory_space<vmem>>, %arg3: memref<32x8xf32, #tpu.memory_space<vmem>>, %arg4: memref<1x8xf32, #tpu.memory_space<vmem>>, %arg5: memref<32x32xf32, #tpu.memory_space<vmem>>, %arg6: memref<1x32xf32, #tpu.memory_space<vmem>>, %arg7: memref<1x8x32xf32, #tpu.memory_space<vmem>>, %arg8: memref<1x4x8x8xf32, #tpu.memory_space<vmem>>) attributes {dimension_semantics = [#tpu.dimension_semantics<parallel>, #tpu.dimension_semantics<parallel>], iteration_bounds = array<i64: 2, 1>, scalar_prefetch = 0 : i64, scratch_operands = 0 : i64, tpu.core_type = #tpu.core_type<tc>, window_params = [{transform_indices = @transform_0, window_bounds = array<i64: 1, 8, 32>}, {pipeline_mode = #tpu.pipeline_mode<synchronous>, transform_indices = @transform_1, window_bounds = array<i64: 32, 8>}, {pipeline_mode = #tpu.pipeline_mode<synchronous>, transform_indices = @transform_2, window_bounds = array<i64: 1, 8>}, {pipeline_mode = #tpu.pipeline_mode<synchronous>, transform_indices = @transform_3, window_bounds = array<i64: 32, 32>}, {pipeline_mode = #tpu.pipeline_mode<synchronous>, transform_indices = @transform_4, window_bounds = array<i64: 1, 32>}, {transform_indices = @transform_5, window_bounds = array<i64: 1, 8, 32>}, {transform_indices = @transform_6, window_bounds = array<i64: 1, 4, 8, 8>}]} {
    %c0 = arith.constant 0 : index
    %c0_0 = arith.constant 0 : index
    %c0_1 = arith.constant 0 : index
    %0 = vector.load %arg2[%c0, %c0_0, %c0_1] : memref<1x8x32xf32, #tpu.memory_space<vmem>>, vector<1x8x32xf32>
    %1 = vector.shape_cast %0 : vector<1x8x32xf32> to vector<8x32xf32>
    %c0_2 = arith.constant 0 : index
    %c0_3 = arith.constant 0 : index
    %2 = vector.load %arg3[%c0_2, %c0_3] : memref<32x8xf32, #tpu.memory_space<vmem>>, vector<32x8xf32>
    %cst = arith.constant dense<0.000000e+00> : vector<8x8xf32>
    %3 = tpu.matmul %1, %2, %cst {dimension_numbers = #tpu.dot_dimension_numbers<[1], [0], [0], [1], [0, 0, 1, 1], [], []>} : vector<8x32xf32>, vector<32x8xf32>, vector<8x8xf32> -> vector<8x8xf32>
    %c0_4 = arith.constant 0 : index
    %c0_5 = arith.constant 0 : index
    %4 = vector.load %arg4[%c0_4, %c0_5] : memref<1x8xf32, #tpu.memory_space<vmem>>, vector<1x8xf32>
    %5 = vector.broadcast %4 : vector<1x8xf32> to vector<8x8xf32>
    %6 = arith.addf %3, %5 : vector<8x8xf32>
    %c0_6 = arith.constant 0 : index
    %c0_7 = arith.constant 0 : index
    %7 = vector.load %arg5[%c0_6, %c0_7] : memref<32x32xf32, #tpu.memory_space<vmem>>, vector<32x32xf32>
    %cst_8 = arith.constant dense<0.000000e+00> : vector<8x32xf32>
    %8 = tpu.matmul %1, %7, %cst_8 {dimension_numbers = #tpu.dot_dimension_numbers<[1], [0], [0], [1], [0, 0, 1, 1], [], []>} : vector<8x32xf32>, vector<32x32xf32>, vector<8x32xf32> -> vector<8x32xf32>
    %c0_9 = arith.constant 0 : index
    %c0_10 = arith.constant 0 : index
    %9 = vector.load %arg6[%c0_9, %c0_10] : memref<1x32xf32, #tpu.memory_space<vmem>>, vector<1x32xf32>
    %10 = vector.broadcast %9 : vector<1x32xf32> to vector<8x32xf32>
    %11 = arith.addf %8, %10 : vector<8x32xf32>
    %12 = vector.extract_strided_slice %11 {offsets = [0, 0], sizes = [8, 8], strides = [1, 1]} : vector<8x32xf32> to vector<8x8xf32>
    %13 = vector.extract_strided_slice %11 {offsets = [0, 8], sizes = [8, 8], strides = [1, 1]} : vector<8x32xf32> to vector<8x8xf32>
    %14 = vector.extract_strided_slice %11 {offsets = [0, 16], sizes = [8, 8], strides = [1, 1]} : vector<8x32xf32> to vector<8x8xf32>
    %15 = vector.extract_strided_slice %11 {offsets = [0, 24], sizes = [8, 8], strides = [1, 1]} : vector<8x32xf32> to vector<8x8xf32>
    %16 = tpu.concatenate %12, %13, %14, %15 in 0 : vector<8x8xf32>, vector<8x8xf32>, vector<8x8xf32>, vector<8x8xf32> -> vector<32x8xf32>
    %cst_11 = arith.constant dense<0.000000e+00> : vector<32x8xf32>
    %17 = tpu.matmul %16, %6, %cst_11 {dimension_numbers = #tpu.dot_dimension_numbers<[1], [1], [0], [0], [0, 0, 1, 0], [], []>} : vector<32x8xf32>, vector<8x8xf32>, vector<32x8xf32> -> vector<32x8xf32>
    %cst_12 = arith.constant dense<0xFF800000> : vector<32xf32>
    %18 = vector.multi_reduction <maximumf>, %17, %cst_12 [1] : vector<32x8xf32> to vector<32xf32>
    %19 = vector.shape_cast %18 : vector<32xf32> to vector<32x1xf32>
    %20 = vector.broadcast %19 : vector<32x1xf32> to vector<32x8xf32>
    %21 = arith.subf %17, %20 : vector<32x8xf32>
    %22 = math.exp %21 : vector<32x8xf32>
    %cst_13 = arith.constant dense<0.000000e+00> : vector<32xf32>
    %23 = vector.multi_reduction <add>, %22, %cst_13 [1] : vector<32x8xf32> to vector<32xf32>
    %24 = vector.shape_cast %23 : vector<32xf32> to vector<32x1xf32>
    %25 = tpu.reciprocal %24 {approx = true} : vector<32x1xf32> -> vector<32x1xf32>
    %26 = vector.broadcast %25 : vector<32x1xf32> to vector<32x8xf32>
    %27 = arith.mulf %22, %26 : vector<32x8xf32>
    %cst_14 = arith.constant dense<0.000000e+00> : vector<32x32xf32>
    %28 = tpu.matmul %27, %1, %cst_14 {dimension_numbers = #tpu.dot_dimension_numbers<[1], [0], [0], [1], [0, 0, 1, 1], [], []>} : vector<32x8xf32>, vector<8x32xf32>, vector<32x32xf32> -> vector<32x32xf32>
    %29 = vector.extract_strided_slice %28 {offsets = [0, 0], sizes = [8, 8], strides = [1, 1]} : vector<32x32xf32> to vector<8x8xf32>
    %30 = vector.extract_strided_slice %28 {offsets = [8, 8], sizes = [8, 8], strides = [1, 1]} : vector<32x32xf32> to vector<8x8xf32>
    %31 = vector.extract_strided_slice %28 {offsets = [16, 16], sizes = [8, 8], strides = [1, 1]} : vector<32x32xf32> to vector<8x8xf32>
    %32 = vector.extract_strided_slice %28 {offsets = [24, 24], sizes = [8, 8], strides = [1, 1]} : vector<32x32xf32> to vector<8x8xf32>
    %33 = tpu.concatenate %29, %30, %31, %32 in 1 : vector<8x8xf32>, vector<8x8xf32>, vector<8x8xf32>, vector<8x8xf32> -> vector<8x32xf32>
    %c0_15 = arith.constant 0 : index
    %c0_16 = arith.constant 0 : index
    %c0_17 = arith.constant 0 : index
    %34 = vector.load %arg7[%c0_15, %c0_16, %c0_17] : memref<1x8x32xf32, #tpu.memory_space<vmem>>, vector<1x8x32xf32>
    %35 = vector.shape_cast %34 : vector<1x8x32xf32> to vector<8x32xf32>
    %36 = vector.shape_cast %33 : vector<8x32xf32> to vector<1x8x32xf32>
    tpu.vector_store %arg7[%c0_15, %c0_16, %c0_17], %36 {strides = array<i32>} : memref<1x8x32xf32, #tpu.memory_space<vmem>>, vector<1x8x32xf32>,
    %37 = vector.shape_cast %27 : vector<32x8xf32> to vector<4x8x8xf32>
    %c0_18 = arith.constant 0 : index
    %c0_19 = arith.constant 0 : index
    %c0_20 = arith.constant 0 : index
    %c0_21 = arith.constant 0 : index
    %38 = vector.load %arg8[%c0_18, %c0_19, %c0_20, %c0_21] : memref<1x4x8x8xf32, #tpu.memory_space<vmem>>, vector<1x4x8x8xf32>
    %39 = vector.shape_cast %38 : vector<1x4x8x8xf32> to vector<4x8x8xf32>
    %40 = vector.shape_cast %37 : vector<4x8x8xf32> to vector<1x4x8x8xf32>
    tpu.vector_store %arg8[%c0_18, %c0_19, %c0_20, %c0_21], %40 {strides = array<i32>} : memref<1x4x8x8xf32, #tpu.memory_space<vmem>>, vector<1x4x8x8xf32>,
    return
  }
  func.func @transform_0(%arg0: i32, %arg1: i32) -> (i32, i32, i32) {
    %c0_i32 = arith.constant 0 : i32
    %c0_i32_0 = arith.constant 0 : i32
    %c0_i32_1 = arith.constant 0 : i32
    return %arg0, %c0_i32, %c0_i32_0 : i32, i32, i32
  }
  func.func @transform_1(%arg0: i32, %arg1: i32) -> (i32, i32) {
    %c0_i32 = arith.constant 0 : i32
    %c0_i32_0 = arith.constant 0 : i32
    %c0_i32_1 = arith.constant 0 : i32
    return %c0_i32, %c0_i32_0 : i32, i32
  }
  func.func @transform_2(%arg0: i32, %arg1: i32) -> (i32, i32) {
    %c0_i32 = arith.constant 0 : i32
    %c0_i32_0 = arith.constant 0 : i32
    %c0_i32_1 = arith.constant 0 : i32
    return %c0_i32, %c0_i32_0 : i32, i32
  }
  func.func @transform_3(%arg0: i32, %arg1: i32) -> (i32, i32) {
    %c0_i32 = arith.constant 0 : i32
    %c0_i32_0 = arith.constant 0 : i32
    %c0_i32_1 = arith.constant 0 : i32
    return %c0_i32, %c0_i32_0 : i32, i32
  }
  func.func @transform_4(%arg0: i32, %arg1: i32) -> (i32, i32) {
    %c0_i32 = arith.constant 0 : i32
    %c0_i32_0 = arith.constant 0 : i32
    %c0_i32_1 = arith.constant 0 : i32
    return %c0_i32, %c0_i32_0 : i32, i32
  }
  func.func @transform_5(%arg0: i32, %arg1: i32) -> (i32, i32, i32) {
    %c0_i32 = arith.constant 0 : i32
    %c0_i32_0 = arith.constant 0 : i32
    return %arg0, %arg1, %c0_i32 : i32, i32, i32
  }
  func.func @transform_6(%arg0: i32, %arg1: i32) -> (i32, i32, i32, i32) {
    %c0_i32 = arith.constant 0 : i32
    %c0_i32_0 = arith.constant 0 : i32
    %c0_i32_1 = arith.constant 0 : i32
    return %arg0, %c0_i32, %arg1, %c0_i32_0 : i32, i32, i32, i32
  }
}

</mosaic_0001>

<llo_original>
// kernel: tpu_custom_call.1
$region0: #{tpu_custom_call.1}
  #allocation0 [shape = 'u32[]', space=smem, size = 0x4, offset = 0x4, fixed_abs, tag = 'smem constant byte address 0x4 - core index']
  #allocation1 [shape = 'u32[144,128]{1,0:T(1,128)}', space=vmem, size = 0x12000, scoped, tag = 'internal scratch']
  %s0 = inlined_call_operand.vmem [shape: f32[2,8,32], index: 0, kind: input, shape index: {}]
  %s1 = inlined_call_operand.vmem [shape: f32[32,8], index: 1, kind: input, shape index: {}]
  %s2 = inlined_call_operand.vmem [shape: f32[1,8], index: 2, kind: input, shape index: {}]
  %s3 = inlined_call_operand.vmem [shape: f32[32,32], index: 3, kind: input, shape index: {}]
  %s4 = inlined_call_operand.vmem [shape: f32[1,32], index: 4, kind: input, shape index: {}]
  %s5 = inlined_call_operand.hbm [shape: f32[2,8,32], index: 5, kind: output, shape index: {0}]
  %s6 = inlined_call_operand.hbm [shape: f32[2,4,8,8], index: 6, kind: output, shape index: {1}]
  %7 = xla_tuple %s5, %s6
  %s8 = sld [smem:[#allocation0]]
  $region61: #{tpu_custom_call.1} parent=0
    _
  %s10 = ssub.s32 1, %s8
  %s11 = scalar_select 0, %s10, %s8
  $region1: #{tpu_custom_call.1} parent=0
    #allocation2 [shape = 'u8[8192]{0}', space=vmem, size = 0x2000, scoped, tag = 'output window, operand 0']
    #allocation3 [shape = 's32[2]{0}', space=sflag, size = 0x8, scoped, tag = 'scoped memory for tpu_custom_call.1']
    #allocation4 [shape = 'u8[32768]{0}', space=vmem, size = 0x8000, scoped, tag = 'output window, operand 1']
    #allocation5 [shape = 's32[2]{0}', space=sflag, size = 0x8, scoped, tag = 'scoped memory for tpu_custom_call.1']
    %12 = vsyncpa [#allocation3], 0
    %s13 = scalar_lea.sflag [#allocation3], 1
    %14 = vsyncpa %s13, 0
    %15 = vsyncpa [#allocation5], 0
    %s16 = scalar_lea.sflag [#allocation5], 1
    %17 = vsyncpa %s16, 0
    loop: start=0, step=1, limit=4
    $region2: #{tpu_custom_call.1} parent=1 // loop_pre_header
      _
    $region3: #{tpu_custom_call.1} parent=1 // loop_header
      %s19 = sphi 0, %s23
      %p20 = scmp.ge.s32.totalorder %s19, 4
      %s26 = sphi 0, %s38
      %s27 = sphi 0, %s34
      %s28 = sphi 0, %s26
      %s29 = sphi 0, %s27
      %s30 = sphi 0, %s28
      %s31 = sphi 0, %s29
      %s41 = sphi 0, %s43
      %s44 = sphi 0, %s41
      %s45 = sphi 0, %s44
      %s61 = sphi 0, %s45
      %s65 = sphi 0, %s65
      %s67 = sphi 0, %s65
      %s68 = sphi 0, %s67
      %s82 = sphi 0, %s68
      %s86 = sphi 0, %s86
      %s88 = sphi 0, %s86
      %s89 = sphi 0, %s88
      %s103 = sphi 0, %s89
      %s107 = sphi 0, %s107
      %s109 = sphi 0, %s107
      %s110 = sphi 0, %s109
      %s124 = sphi 0, %s110
      %s128 = sphi 0, %s128
      %s130 = sphi 0, %s128
      %s131 = sphi 0, %s130
      %s145 = sphi 0, %s131
      %s153 = sphi 0, %s155
      %s156 = sphi 0, %s153
      %s157 = sphi 0, %s156
      %s173 = sphi 0, %s157
      %s181 = sphi 0, %s183
      %s184 = sphi 0, %s181
      %s185 = sphi 0, %s184
      %s201 = sphi 0, %s185
    $region4: #{tpu_custom_call.1} parent=1 // loop_header_branch
      %22 = sbr.rel (%p20) target = $region8
    $region5: #{tpu_custom_call.1} parent=1 // loop_body
      %s24 = ssub.s32 %s19, 1
      %s25 = ssub.s32 %s19, 2
      %s32 = sadd.s32 1, %s27
      %p33 = scmp.ge.s32.totalorder %s32, 1
      %s34 = scalar_select %p33, 0, %s32
      %s35 = sadd.s32 1, %s26
      %s36 = scalar_select %p33, %s35, %s26
      %p37 = scmp.ge.s32.totalorder %s36, 2
      %s38 = scalar_select %p37, 0, %s36
      %s39 = ssub.s32 %s26, %s38
      %p40 = scmp.eq.s32.totalorder %s39, 0
      %s42 = sadd.s32 %s41, 1
      %s43 = scalar_select %p40, %s41, %s42
      %p46 = pneg %p40
      %p47 = scmp.eq.s32.totalorder %s19, 1
      %p48 = por %p46, %p47
      %p49 = scmp.ne.s32.totalorder %s41, %s44
      %p50 = scmp.eq.s32.totalorder %s19, 0
      %p51 = por %p49, %p50
      %p52 = scmp.ne.s32.totalorder %s41, %s44
      %p53 = scmp.eq.s32.totalorder %s24, 1
      %p54 = por %p52, %p53
      %p55 = scmp.ne.s32.totalorder %s44, %s45
      %p56 = scmp.eq.s32.totalorder %s24, 0
      %p57 = por %p55, %p56
      %p58 = scmp.ne.s32.totalorder %s44, %s45
      %p59 = scmp.eq.s32.totalorder %s25, 1
      %p60 = por %p58, %p59
      %p62 = scmp.ne.s32.totalorder %s45, %s61
      %p63 = scmp.eq.s32.totalorder %s25, 0
      %p64 = por %p62, %p63
      %s66 = sadd.s32 %s65, 1
      %p69 = scmp.eq.s32.totalorder %s19, 1
      %p70 = scmp.ne.s32.totalorder %s65, %s67
      %p71 = scmp.eq.s32.totalorder %s19, 0
      %p72 = por %p70, %p71
      %p73 = scmp.ne.s32.totalorder %s65, %s67
      %p74 = scmp.eq.s32.totalorder %s24, 1
      %p75 = por %p73, %p74
      %p76 = scmp.ne.s32.totalorder %s67, %s68
      %p77 = scmp.eq.s32.totalorder %s24, 0
      %p78 = por %p76, %p77
      %p79 = scmp.ne.s32.totalorder %s67, %s68
      %p80 = scmp.eq.s32.totalorder %s25, 1
      %p81 = por %p79, %p80
      %p83 = scmp.ne.s32.totalorder %s68, %s82
      %p84 = scmp.eq.s32.totalorder %s25, 0
      %p85 = por %p83, %p84
      %s87 = sadd.s32 %s86, 1
      %p90 = scmp.eq.s32.totalorder %s19, 1
      %p91 = scmp.ne.s32.totalorder %s86, %s88
      %p92 = scmp.eq.s32.totalorder %s19, 0
      %p93 = por %p91, %p92
      %p94 = scmp.ne.s32.totalorder %s86, %s88
      %p95 = scmp.eq.s32.totalorder %s24, 1
      %p96 = por %p94, %p95
      %p97 = scmp.ne.s32.totalorder %s88, %s89
      %p98 = scmp.eq.s32.totalorder %s24, 0
      %p99 = por %p97, %p98
      %p100 = scmp.ne.s32.totalorder %s88, %s89
      %p101 = scmp.eq.s32.totalorder %s25, 1
      %p102 = por %p100, %p101
      %p104 = scmp.ne.s32.totalorder %s89, %s103
      %p105 = scmp.eq.s32.totalorder %s25, 0
      %p106 = por %p104, %p105
      %s108 = sadd.s32 %s107, 1
      %p111 = scmp.eq.s32.totalorder %s19, 1
      %p112 = scmp.ne.s32.totalorder %s107, %s109
      %p113 = scmp.eq.s32.totalorder %s19, 0
      %p114 = por %p112, %p113
      %p115 = scmp.ne.s32.totalorder %s107, %s109
      %p116 = scmp.eq.s32.totalorder %s24, 1
      %p117 = por %p115, %p116
      %p118 = scmp.ne.s32.totalorder %s109, %s110
      %p119 = scmp.eq.s32.totalorder %s24, 0
      %p120 = por %p118, %p119
      %p121 = scmp.ne.s32.totalorder %s109, %s110
      %p122 = scmp.eq.s32.totalorder %s25, 1
      %p123 = por %p121, %p122
      %p125 = scmp.ne.s32.totalorder %s110, %s124
      %p126 = scmp.eq.s32.totalorder %s25, 0
      %p127 = por %p125, %p126
      %s129 = sadd.s32 %s128, 1
      %p132 = scmp.eq.s32.totalorder %s19, 1
      %p133 = scmp.ne.s32.totalorder %s128, %s130
      %p134 = scmp.eq.s32.totalorder %s19, 0
      %p135 = por %p133, %p134
      %p136 = scmp.ne.s32.totalorder %s128, %s130
      %p137 = scmp.eq.s32.totalorder %s24, 1
      %p138 = por %p136, %p137
      %p139 = scmp.ne.s32.totalorder %s130, %s131
      %p140 = scmp.eq.s32.totalorder %s24, 0
      %p141 = por %p139, %p140
      %p142 = scmp.ne.s32.totalorder %s130, %s131
      %p143 = scmp.eq.s32.totalorder %s25, 1
      %p144 = por %p142, %p143
      %p146 = scmp.ne.s32.totalorder %s131, %s145
      %p147 = scmp.eq.s32.totalorder %s25, 0
      %p148 = por %p146, %p147
      %s149 = ssub.s32 %s26, %s38
      %s150 = ssub.s32 %s27, %s34
      %s151 = sor.u32 %s149, %s150
      %p152 = scmp.eq.s32.totalorder %s151, 0
      %s154 = sadd.s32 %s153, 1
      %s155 = scalar_select %p152, %s153, %s154
      %p158 = pneg %p152
      %p159 = scmp.eq.s32.totalorder %s19, 1
      %p160 = por %p158, %p159
      %p161 = scmp.ne.s32.totalorder %s153, %s156
      %p162 = scmp.eq.s32.totalorder %s19, 0
      %p163 = por %p161, %p162
      %p164 = scmp.ne.s32.totalorder %s153, %s156
      %p165 = scmp.eq.s32.totalorder %s24, 1
      %p166 = por %p164, %p165
      %p167 = scmp.ne.s32.totalorder %s156, %s157
      %p168 = scmp.eq.s32.totalorder %s24, 0
      %p169 = por %p167, %p168
      %p170 = scmp.ne.s32.totalorder %s156, %s157
      %p171 = scmp.eq.s32.totalorder %s25, 1
      %p172 = por %p170, %p171
      %p174 = scmp.ne.s32.totalorder %s157, %s173
      %p175 = scmp.eq.s32.totalorder %s25, 0
      %p176 = por %p174, %p175
      %s177 = ssub.s32 %s26, %s38
      %s178 = ssub.s32 %s27, %s34
      %s179 = sor.u32 %s177, %s178
      %p180 = scmp.eq.s32.totalorder %s179, 0
      %s182 = sadd.s32 %s181, 1
      %s183 = scalar_select %p180, %s181, %s182
      %p186 = pneg %p180
      %p187 = scmp.eq.s32.totalorder %s19, 1
      %p188 = por %p186, %p187
      %p189 = scmp.ne.s32.totalorder %s181, %s184
      %p190 = scmp.eq.s32.totalorder %s19, 0
      %p191 = por %p189, %p190
      %p192 = scmp.ne.s32.totalorder %s181, %s184
      %p193 = scmp.eq.s32.totalorder %s24, 1
      %p194 = por %p192, %p193
      %p195 = scmp.ne.s32.totalorder %s184, %s185
      %p196 = scmp.eq.s32.totalorder %s24, 0
      %p197 = por %p195, %p196
      %p198 = scmp.ne.s32.totalorder %s184, %s185
      %p199 = scmp.eq.s32.totalorder %s25, 1
      %p200 = por %p198, %p199
      %p202 = scmp.ne.s32.totalorder %s185, %s201
      %p203 = scmp.eq.s32.totalorder %s25, 0
      %p204 = por %p202, %p203
      %p205 = scmp.le.s32.totalorder 1, %s19
      %p206 = scmp.lt.s32.totalorder %s19, 3
      %p207 = pnand %p205, %p206
      %p208 = pneg %p207
      // Predicated region
      $region9: #{tpu_custom_call.1} parent=5 // pred_check
        _
      $region10: #{tpu_custom_call.1} parent=5 // pred_check_branch
        %210 = sbr.rel (%p207) target = $region12
      $region11: #{tpu_custom_call.1} parent=5 // pred_region
        %s211 = ssub.s32 %s19, 1
        // Predicated region
        $region13: #{tpu_custom_call.1} parent=11 // pred_check
          %p212 = pneg %p78
        $region14: #{tpu_custom_call.1} parent=11 // pred_check_branch
          %214 = sbr.rel (%p212) target = $region16
        $region15: #{tpu_custom_call.1} parent=11 // pred_region
          _
        $region16: #{tpu_custom_call.1} parent=11 // pred_fallthru
          _
        // Predicated region
        $region17: #{tpu_custom_call.1} parent=11 // pred_check
          %p215 = pneg %p99
        $region18: #{tpu_custom_call.1} parent=11 // pred_check_branch
          %217 = sbr.rel (%p215) target = $region20
        $region19: #{tpu_custom_call.1} parent=11 // pred_region
          _
        $region20: #{tpu_custom_call.1} parent=11 // pred_fallthru
          _
        // Predicated region
        $region21: #{tpu_custom_call.1} parent=11 // pred_check
          %p218 = pneg %p120
        $region22: #{tpu_custom_call.1} parent=11 // pred_check_branch
          %220 = sbr.rel (%p218) target = $region24
        $region23: #{tpu_custom_call.1} parent=11 // pred_region
          _
        $region24: #{tpu_custom_call.1} parent=11 // pred_fallthru
          _
        // Predicated region
        $region25: #{tpu_custom_call.1} parent=11 // pred_check
          %p221 = pneg %p141
        $region26: #{tpu_custom_call.1} parent=11 // pred_check_branch
          %223 = sbr.rel (%p221) target = $region28
        $region27: #{tpu_custom_call.1} parent=11 // pred_region
          _
        $region28: #{tpu_custom_call.1} parent=11 // pred_fallthru
          _
      $region12: #{tpu_custom_call.1} parent=5 // pred_fallthru
        _
      %p224 = scmp.lt.s32.totalorder %s19, 2
      // Predicated region
      $region29: #{tpu_custom_call.1} parent=5 // pred_check
        %p225 = pneg %p224
      $region30: #{tpu_custom_call.1} parent=5 // pred_check_branch
        %227 = sbr.rel (%p225) target = $region32
      $region31: #{tpu_custom_call.1} parent=5 // pred_region
        // Predicated region
        $region33: #{tpu_custom_call.1} parent=31 // pred_check
          %p228 = pneg %p51
        $region34: #{tpu_custom_call.1} parent=31 // pred_check_branch
          %230 = sbr.rel (%p228) target = $region36
        $region35: #{tpu_custom_call.1} parent=31 // pred_region
          %p231 = scmp.lt.s32.totalorder %s26, 1
          %s232 = scalar_select %p231, %s26, 1
          %s233 = smul.addr %s232, 8
          %s234 = scalar_lea.vmem %s0, %s233
        $region36: #{tpu_custom_call.1} parent=31 // pred_fallthru
          _
      $region32: #{tpu_custom_call.1} parent=5 // pred_fallthru
        _
      %p235 = scmp.le.s32.totalorder 1, %s19
      %p236 = scmp.lt.s32.totalorder %s19, 3
      %p237 = pnand %p235, %p236
      %p238 = pneg %p237
      // Predicated region
      $region37: #{tpu_custom_call.1} parent=5 // pred_check
        _
      $region38: #{tpu_custom_call.1} parent=5 // pred_check_branch
        %240 = sbr.rel (%p237) target = $region40
      $region39: #{tpu_custom_call.1} parent=5 // pred_region
        %s241 = ssub.s32 %s19, 1
        %p242 = scmp.lt.s32.totalorder %s28, 1
        %s243 = scalar_select %p242, %s28, 1
        %s244 = smul.addr %s243, 8
        %s245 = scalar_lea.vmem %s0, %s244
        %p246 = pneg %p57
        %p247 = pneg %p54
        %p248 = pneg %p78
        %p249 = pneg %p75
        %p250 = pneg %p99
        %p251 = pneg %p96
        %p252 = pneg %p120
        %p253 = pneg %p117
        %p254 = pneg %p141
        %p255 = pneg %p138
        %p256 = pneg %p169
        %p257 = pneg %p166
        %s258 = sand.u32 %s156, 1
        %s259 = scalar_lea.sflag [#allocation3], %s258
        %s260 = sand.u32 %s156, 1
        %s261 = smul.addr %s260, 8
        %s262 = scalar_lea.vmem [#allocation2], %s261
        %p263 = pneg %p197
        %p264 = pneg %p194
        %s265 = sand.u32 %s184, 1
        %s266 = scalar_lea.sflag [#allocation5], %s265
        %s267 = sand.u32 %s184, 1
        %s268 = smul.addr %s267, 32
        %s269 = scalar_lea.vmem [#allocation4], %s268
        %p270 = scmp.lt.s32.totalorder %s28, 1
        %s271 = scalar_select %p270, %s28, 1
        %s272 = smul.addr %s271, 8
        %s273 = scalar_lea.vmem %s0, %s272
        %v274 = vld [vmem:[%s273] sm:$0xff]
        %v275 = vld [vmem:[%s1] sm:$0xff]
        %v276 = vld [vmem:[%s1 + $0x8] sm:$0xff]
        %v277 = vld [vmem:[%s1 + $0x10] sm:$0xff]
        %v278 = vld [vmem:[%s1 + $0x18] sm:$0xff]
        %v279 = vld [vmem:[%s2] sm:$0x1]
        %v281 = vlaneseq
        %v282 = vshrl.u32 %v281, 7
        %v283 = vsub.s32 0, %v282
        %v284 = vrot.slane %v279, %v283
        %vm286 = vcmask 261120
        %v288 = vsel %vm286, %v274, 0
        %290 = vmatprep.subr.mxu0 0.0
        %291 = vmatpush1.msra.mxu0 %v275
        %292 = vmatprep.subr.mxu0 0.0
        %293 = vmatpush1.msra.mxu0 %v276
        %294 = vmatprep.subr.mxu0 0.0
        %295 = vmatpush1.msra.mxu0 %v277
        %296 = vmatprep.subr.mxu0 0.0
        %297 = vmatpush1.msra.mxu0 %v278
        %298 = vmatprep.subr.mxu0 0.0
        %299 = vmatpush1.msra.mxu0 0.0
        %300 = vmatprep.subr.mxu0 0.0
        %301 = vmatpush1.msra.mxu0 0.0
        %302 = vmatprep.subr.mxu0 0.0
        %303 = vmatpush1.msra.mxu0 0.0
        %304 = vmatprep.subr.mxu0 0.0
        %305 = vmatpush1.msra.mxu0 0.0
        %306 = vmatprep.subr.mxu0 0.0
        %307 = vmatpush1.msra.mxu0 0.0
        %308 = vmatprep.subr.mxu0 0.0
        %309 = vmatpush1.msra.mxu0 0.0
        %310 = vmatprep.subr.mxu0 0.0
        %311 = vmatpush1.msra.mxu0 0.0
        %312 = vmatprep.subr.mxu0 0.0
        %313 = vmatpush1.msra.mxu0 0.0
        %314 = vmatprep.subr.mxu0 0.0
        %315 = vmatpush1.msra.mxu0 0.0
        %316 = vmatprep.subr.mxu0 0.0
        %317 = vmatpush1.msra.mxu0 0.0
        %318 = vmatprep.subr.mxu0 0.0
        %319 = vmatpush1.msra.mxu0 0.0
        %320 = vmatprep.subr.mxu0 0.0
        %321 = vmatpush1.msra.mxu0 0.0
        %322 = vmatprep.subr.mxu0 0.0
        %323 = vmatpush1.msra.mxu0 0.0
        %324 = vmatprep.subr.mxu0 0.0
        %325 = vmatpush1.msra.mxu0 0.0
        %326 = vmatprep.subr.mxu0 0.0
        %327 = vmatpush1.msra.mxu0 0.0
        %328 = vmatprep.subr.mxu0 0.0
        %329 = vmatpush1.msra.mxu0 0.0
        %330 = vmatprep.subr.mxu0 0.0
        %331 = vmatpush1.msra.mxu0 0.0
        %332 = vmatprep.subr.mxu0 0.0
        %333 = vmatpush1.msra.mxu0 0.0
        %334 = vmatprep.subr.mxu0 0.0
        %335 = vmatpush1.msra.mxu0 0.0
        %336 = vmatprep.subr.mxu0 0.0
        %337 = vmatpush1.msra.mxu0 0.0
        %338 = vmatprep.subr.mxu0 0.0
        %339 = vmatpush1.msra.mxu0 0.0
        %340 = vmatprep.subr.mxu0 0.0
        %341 = vmatpush1.msra.mxu0 0.0
        %342 = vmatprep.subr.mxu0 0.0
        %343 = vmatpush1.msra.mxu0 0.0
        %344 = vmatprep.subr.mxu0 0.0
        %345 = vmatpush1.msra.mxu0 0.0
        %346 = vmatprep.subr.mxu0 0.0
        %347 = vmatpush1.msra.mxu0 0.0
        %348 = vmatprep.subr.mxu0 0.0
        %349 = vmatpush1.msra.mxu0 0.0
        %350 = vmatprep.subr.mxu0 0.0
        %351 = vmatpush1.msra.mxu0 0.0
        %352 = vmatprep.subr.mxu0 0.0
        %353 = vmatpush1.msra.mxu0 0.0
        %354 = vmatprep.mubr.f32.mxu0 0.0
        %355 = vmatmul.mubr.f32.gmra.mrb[0].mxu0 %v288
        %v356 = vpop.f32.mrb[0].mxu0
        %v357 = vadd.f32 %v284, %v356
        %v358 = vpop.f32.mrb[0].mxu0
        %359 = vdwg.mxu0
        %v360 = vld [vmem:[%s3] sm:$0xff]
        %v361 = vld [vmem:[%s3 + $0x8] sm:$0xff]
        %v362 = vld [vmem:[%s3 + $0x10] sm:$0xff]
        %v363 = vld [vmem:[%s3 + $0x18] sm:$0xff]
        %v364 = vld [vmem:[%s4] sm:$0x1]
        %v366 = vlaneseq
        %v367 = vshrl.u32 %v366, 7
        %v368 = vsub.s32 0, %v367
        %v369 = vrot.slane %v364, %v368
        %371 = vmatprep.subr.mxu0 0.0
        %372 = vmatpush1.msra.mxu0 %v360
        %373 = vmatprep.subr.mxu0 0.0
        %374 = vmatpush1.msra.mxu0 %v361
        %375 = vmatprep.subr.mxu0 0.0
        %376 = vmatpush1.msra.mxu0 %v362
        %377 = vmatprep.subr.mxu0 0.0
        %378 = vmatpush1.msra.mxu0 %v363
        %379 = vmatprep.subr.mxu0 0.0
        %380 = vmatpush1.msra.mxu0 0.0
        %381 = vmatprep.subr.mxu0 0.0
        %382 = vmatpush1.msra.mxu0 0.0
        %383 = vmatprep.subr.mxu0 0.0
        %384 = vmatpush1.msra.mxu0 0.0
        %385 = vmatprep.subr.mxu0 0.0
        %386 = vmatpush1.msra.mxu0 0.0
        %387 = vmatprep.subr.mxu0 0.0
        %388 = vmatpush1.msra.mxu0 0.0
        %389 = vmatprep.subr.mxu0 0.0
        %390 = vmatpush1.msra.mxu0 0.0
        %391 = vmatprep.subr.mxu0 0.0
        %392 = vmatpush1.msra.mxu0 0.0
        %393 = vmatprep.subr.mxu0 0.0
        %394 = vmatpush1.msra.mxu0 0.0
        %395 = vmatprep.subr.mxu0 0.0
        %396 = vmatpush1.msra.mxu0 0.0
        %397 = vmatprep.subr.mxu0 0.0
        %398 = vmatpush1.msra.mxu0 0.0
        %399 = vmatprep.subr.mxu0 0.0
        %400 = vmatpush1.msra.mxu0 0.0
        %401 = vmatprep.subr.mxu0 0.0
        %402 = vmatpush1.msra.mxu0 0.0
        %403 = vmatprep.subr.mxu0 0.0
        %404 = vmatpush1.msra.mxu0 0.0
        %405 = vmatprep.subr.mxu0 0.0
        %406 = vmatpush1.msra.mxu0 0.0
        %407 = vmatprep.subr.mxu0 0.0
        %408 = vmatpush1.msra.mxu0 0.0
        %409 = vmatprep.subr.mxu0 0.0
        %410 = vmatpush1.msra.mxu0 0.0
        %411 = vmatprep.subr.mxu0 0.0
        %412 = vmatpush1.msra.mxu0 0.0
        %413 = vmatprep.subr.mxu0 0.0
        %414 = vmatpush1.msra.mxu0 0.0
        %415 = vmatprep.subr.mxu0 0.0
        %416 = vmatpush1.msra.mxu0 0.0
        %417 = vmatprep.subr.mxu0 0.0
        %418 = vmatpush1.msra.mxu0 0.0
        %419 = vmatprep.subr.mxu0 0.0
        %420 = vmatpush1.msra.mxu0 0.0
        %421 = vmatprep.subr.mxu0 0.0
        %422 = vmatpush1.msra.mxu0 0.0
        %423 = vmatprep.subr.mxu0 0.0
        %424 = vmatpush1.msra.mxu0 0.0
        %425 = vmatprep.subr.mxu0 0.0
        %426 = vmatpush1.msra.mxu0 0.0
        %427 = vmatprep.subr.mxu0 0.0
        %428 = vmatpush1.msra.mxu0 0.0
        %429 = vmatprep.subr.mxu0 0.0
        %430 = vmatpush1.msra.mxu0 0.0
        %431 = vmatprep.subr.mxu0 0.0
        %432 = vmatpush1.msra.mxu0 0.0
        %433 = vmatprep.subr.mxu0 0.0
        %434 = vmatpush1.msra.mxu0 0.0
        %435 = vmatprep.mubr.f32.mxu0 0.0
        %436 = vmatmul.mubr.f32.gmra.mrb[0].mxu0 %v288
        %v437 = vpop.f32.mrb[0].mxu0
        %v438 = vadd.f32 %v369, %v437
        %v439 = vpop.f32.mrb[0].mxu0
        %440 = vdwg.mxu0
        %442 = vrot.lane.b32.xlu0 %v438, 120
        %v443 = vpop.permute.xlu0 %442
        %444 = vrot.lane.b32.xlu0 %v438, 112
        %v445 = vpop.permute.xlu0 %444
        %446 = vrot.lane.b32.xlu0 %v438, 104
        %v447 = vpop.permute.xlu0 %446
        %vm448 = vcmask 64512
        %v449 = vsel %vm448, %v438, 0
        %v451 = vsel %vm448, %v443, 0
        %v453 = vsel %vm448, %v445, 0
        %v455 = vsel %vm448, %v447, 0
        %v458 = vsel %vm448, %v357, 0
        %460 = vmatprep.subr.mxu0 0.0
        %461 = vmatpush1.xpose.msra.mxu0 %v458
        %462 = vmatprep.subr.mxu0 0.0
        %463 = vmatpush1.xpose.msra.mxu0 0.0
        %464 = vmatprep.subr.mxu0 0.0
        %465 = vmatpush1.xpose.msra.mxu0 0.0
        %466 = vmatprep.subr.mxu0 0.0
        %467 = vmatpush1.xpose.msra.mxu0 0.0
        %468 = vmatprep.subr.mxu0 0.0
        %469 = vmatpush1.xpose.msra.mxu0 0.0
        %470 = vmatprep.subr.mxu0 0.0
        %471 = vmatpush1.xpose.msra.mxu0 0.0
        %472 = vmatprep.subr.mxu0 0.0
        %473 = vmatpush1.xpose.msra.mxu0 0.0
        %474 = vmatprep.subr.mxu0 0.0
        %475 = vmatpush1.xpose.msra.mxu0 0.0
        %476 = vmatprep.subr.mxu0 0.0
        %477 = vmatpush1.xpose.msra.mxu0 0.0
        %478 = vmatprep.subr.mxu0 0.0
        %479 = vmatpush1.xpose.msra.mxu0 0.0
        %480 = vmatprep.subr.mxu0 0.0
        %481 = vmatpush1.xpose.msra.mxu0 0.0
        %482 = vmatprep.subr.mxu0 0.0
        %483 = vmatpush1.xpose.msra.mxu0 0.0
        %484 = vmatprep.subr.mxu0 0.0
        %485 = vmatpush1.xpose.msra.mxu0 0.0
        %486 = vmatprep.subr.mxu0 0.0
        %487 = vmatpush1.xpose.msra.mxu0 0.0
        %488 = vmatprep.subr.mxu0 0.0
        %489 = vmatpush1.xpose.msra.mxu0 0.0
        %490 = vmatprep.subr.mxu0 0.0
        %491 = vmatpush1.xpose.msra.mxu0 0.0
        %492 = vmatprep.subr.mxu0 0.0
        %493 = vmatpush1.xpose.msra.mxu0 0.0
        %494 = vmatprep.subr.mxu0 0.0
        %495 = vmatpush1.xpose.msra.mxu0 0.0
        %496 = vmatprep.subr.mxu0 0.0
        %497 = vmatpush1.xpose.msra.mxu0 0.0
        %498 = vmatprep.subr.mxu0 0.0
        %499 = vmatpush1.xpose.msra.mxu0 0.0
        %500 = vmatprep.subr.mxu0 0.0
        %501 = vmatpush1.xpose.msra.mxu0 0.0
        %502 = vmatprep.subr.mxu0 0.0
        %503 = vmatpush1.xpose.msra.mxu0 0.0
        %504 = vmatprep.subr.mxu0 0.0
        %505 = vmatpush1.xpose.msra.mxu0 0.0
        %506 = vmatprep.subr.mxu0 0.0
        %507 = vmatpush1.xpose.msra.mxu0 0.0
        %508 = vmatprep.subr.mxu0 0.0
        %509 = vmatpush1.xpose.msra.mxu0 0.0
        %510 = vmatprep.subr.mxu0 0.0
        %511 = vmatpush1.xpose.msra.mxu0 0.0
        %512 = vmatprep.subr.mxu0 0.0
        %513 = vmatpush1.xpose.msra.mxu0 0.0
        %514 = vmatprep.subr.mxu0 0.0
        %515 = vmatpush1.xpose.msra.mxu0 0.0
        %516 = vmatprep.subr.mxu0 0.0
        %517 = vmatpush1.xpose.msra.mxu0 0.0
        %518 = vmatprep.subr.mxu0 0.0
        %519 = vmatpush1.xpose.msra.mxu0 0.0
        %520 = vmatprep.subr.mxu0 0.0
        %521 = vmatpush1.xpose.msra.mxu0 0.0
        %522 = vmatprep.subr.mxu0 0.0
        %523 = vmatpush1.xpose.msra.mxu0 0.0
        %524 = vmatprep.mubr.f32.mxu0 0.0
        %525 = vmatmul.mubr.f32.gmra.mrb[0].mxu0 %v449
        %v526 = vpop.f32.mrb[0].mxu0
        %v527 = vadd.f32 0.0, %v526
        %v528 = vpop.f32.mrb[0].mxu0
        %529 = vmatprep.mubr.f32.mxu0 0.0
        %530 = vmatmul.mubr.f32.gmra.mrb[0].mxu0 %v451
        %v531 = vpop.f32.mrb[0].mxu0
        %v532 = vadd.f32 0.0, %v531
        %v533 = vpop.f32.mrb[0].mxu0
        %534 = vmatprep.mubr.f32.mxu0 0.0
        %535 = vmatmul.mubr.f32.gmra.mrb[0].mxu0 %v453
        %v536 = vpop.f32.mrb[0].mxu0
        %v537 = vadd.f32 0.0, %v536
        %v538 = vpop.f32.mrb[0].mxu0
        %539 = vmatprep.mubr.f32.mxu0 0.0
        %540 = vmatmul.mubr.f32.gmra.mrb[0].mxu0 %v455
        %v541 = vpop.f32.mrb[0].mxu0
        %v542 = vadd.f32 0.0, %v541
        %v543 = vpop.f32.mrb[0].mxu0
        %544 = vdwg.mxu0
        %v545 = vsel %vm448, %v527, -inf
        %546 = vmax.xlane.f32.xlu0 %v545
        %v547 = vpop.xlane.xlu0 %546
        %v548 = vsel %vm448, %v532, -inf
        %549 = vmax.xlane.f32.xlu0 %v548
        %v550 = vpop.xlane.xlu0 %549
        %v551 = vsel %vm448, %v537, -inf
        %552 = vmax.xlane.f32.xlu0 %v551
        %v553 = vpop.xlane.xlu0 %552
        %v554 = vsel %vm448, %v542, -inf
        %555 = vmax.xlane.f32.xlu0 %v554
        %v556 = vpop.xlane.xlu0 %555
        %v557 = vsub.f32 %v527, %v547
        %v558 = vsub.f32 %v532, %v550
        %v559 = vsub.f32 %v537, %v553
        %v560 = vsub.f32 %v542, %v556
        %v561 = vmul.f32 %v557, 1.442695
        %v562 = vpow.pop %v561
        %v563 = vmul.f32 %v558, 1.442695
        %v564 = vpow.pop %v563
        %v565 = vmul.f32 %v559, 1.442695
        %v566 = vpow.pop %v565
        %v567 = vmul.f32 %v560, 1.442695
        %v568 = vpow.pop %v567
        %v569 = vsel %vm448, %v562, 0.0
        %570 = vadd.xlane.f32.xlu0 %v569
        %v571 = vpop.xlane.xlu0 %570
        %v572 = vsel %vm448, %v564, 0.0
        %573 = vadd.xlane.f32.xlu0 %v572
        %v574 = vpop.xlane.xlu0 %573
        %v575 = vsel %vm448, %v566, 0.0
        %576 = vadd.xlane.f32.xlu0 %v575
        %v577 = vpop.xlane.xlu0 %576
        %v578 = vsel %vm448, %v568, 0.0
        %579 = vadd.xlane.f32.xlu0 %v578
        %v580 = vpop.xlane.xlu0 %579
        %v581 = vrcp.pop %v571
        %v582 = vrcp.pop %v574
        %v583 = vrcp.pop %v577
        %v584 = vrcp.pop %v580
        %v585 = vmul.f32 %v562, %v581
        %v586 = vmul.f32 %v564, %v582
        %v587 = vmul.f32 %v566, %v583
        %v588 = vmul.f32 %v568, %v584
        %v590 = vsel %vm448, %v585, 0
        %v593 = vsel %vm448, %v586, 0
        %v596 = vsel %vm448, %v587, 0
        %v599 = vsel %vm448, %v588, 0
        %601 = vmatprep.subr.mxu0 0.0
        %602 = vmatpush1.msra.mxu0 %v274
        %603 = vmatprep.subr.mxu0 0.0
        %604 = vmatpush1.msra.mxu0 0.0
        %605 = vmatprep.subr.mxu0 0.0
        %606 = vmatpush1.msra.mxu0 0.0
        %607 = vmatprep.subr.mxu0 0.0
        %608 = vmatpush1.msra.mxu0 0.0
        %609 = vmatprep.subr.mxu0 0.0
        %610 = vmatpush1.msra.mxu0 0.0
        %611 = vmatprep.subr.mxu0 0.0
        %612 = vmatpush1.msra.mxu0 0.0
        %613 = vmatprep.subr.mxu0 0.0
        %614 = vmatpush1.msra.mxu0 0.0
        %615 = vmatprep.subr.mxu0 0.0
        %616 = vmatpush1.msra.mxu0 0.0
        %617 = vmatprep.subr.mxu0 0.0
        %618 = vmatpush1.msra.mxu0 0.0
        %619 = vmatprep.subr.mxu0 0.0
        %620 = vmatpush1.msra.mxu0 0.0
        %621 = vmatprep.subr.mxu0 0.0
        %622 = vmatpush1.msra.mxu0 0.0
        %623 = vmatprep.subr.mxu0 0.0
        %624 = vmatpush1.msra.mxu0 0.0
        %625 = vmatprep.subr.mxu0 0.0
        %626 = vmatpush1.msra.mxu0 0.0
        %627 = vmatprep.subr.mxu0 0.0
        %628 = vmatpush1.msra.mxu0 0.0
        %629 = vmatprep.subr.mxu0 0.0
        %630 = vmatpush1.msra.mxu0 0.0
        %631 = vmatprep.subr.mxu0 0.0
        %632 = vmatpush1.msra.mxu0 0.0
        %633 = vmatprep.subr.mxu0 0.0
        %634 = vmatpush1.msra.mxu0 0.0
        %635 = vmatprep.subr.mxu0 0.0
        %636 = vmatpush1.msra.mxu0 0.0
        %637 = vmatprep.subr.mxu0 0.0
        %638 = vmatpush1.msra.mxu0 0.0
        %639 = vmatprep.subr.mxu0 0.0
        %640 = vmatpush1.msra.mxu0 0.0
        %641 = vmatprep.subr.mxu0 0.0
        %642 = vmatpush1.msra.mxu0 0.0
        %643 = vmatprep.subr.mxu0 0.0
        %644 = vmatpush1.msra.mxu0 0.0
        %645 = vmatprep.subr.mxu0 0.0
        %646 = vmatpush1.msra.mxu0 0.0
        %647 = vmatprep.subr.mxu0 0.0
        %648 = vmatpush1.msra.mxu0 0.0
        %649 = vmatprep.subr.mxu0 0.0
        %650 = vmatpush1.msra.mxu0 0.0
        %651 = vmatprep.subr.mxu0 0.0
        %652 = vmatpush1.msra.mxu0 0.0
        %653 = vmatprep.subr.mxu0 0.0
        %654 = vmatpush1.msra.mxu0 0.0
        %655 = vmatprep.subr.mxu0 0.0
        %656 = vmatpush1.msra.mxu0 0.0
        %657 = vmatprep.subr.mxu0 0.0
        %658 = vmatpush1.msra.mxu0 0.0
        %659 = vmatprep.subr.mxu0 0.0
        %660 = vmatpush1.msra.mxu0 0.0
        %661 = vmatprep.subr.mxu0 0.0
        %662 = vmatpush1.msra.mxu0 0.0
        %663 = vmatprep.subr.mxu0 0.0
        %664 = vmatpush1.msra.mxu0 0.0
        %665 = vmatprep.mubr.f32.mxu0 0.0
        %666 = vmatmul.mubr.f32.gmra.mrb[0].mxu0 %v590
        %v667 = vpop.f32.mrb[0].mxu0
        %v668 = vadd.f32 0.0, %v667
        %v669 = vpop.f32.mrb[0].mxu0
        %670 = vmatprep.mubr.f32.mxu0 0.0
        %671 = vmatmul.mubr.f32.gmra.mrb[0].mxu0 %v593
        %v672 = vpop.f32.mrb[0].mxu0
        %v673 = vadd.f32 0.0, %v672
        %v674 = vpop.f32.mrb[0].mxu0
        %675 = vmatprep.mubr.f32.mxu0 0.0
        %676 = vmatmul.mubr.f32.gmra.mrb[0].mxu0 %v596
        %v677 = vpop.f32.mrb[0].mxu0
        %v678 = vadd.f32 0.0, %v677
        %v679 = vpop.f32.mrb[0].mxu0
        %680 = vmatprep.mubr.f32.mxu0 0.0
        %681 = vmatmul.mubr.f32.gmra.mrb[0].mxu0 %v599
        %v682 = vpop.f32.mrb[0].mxu0
        %v683 = vadd.f32 0.0, %v682
        %v684 = vpop.f32.mrb[0].mxu0
        %685 = vdwg.mxu0
        %v686 = vsel %vm448, %v668, %v673
        %vm687 = vcmask 130048
        %v688 = vsel %vm687, %v686, %v678
        %vm689 = vcmask 195584
        %v690 = vsel %vm689, %v688, %v683
        %691 = vst.msk [vmem:[%s262] sm:$0xff] %vm286, %v690
        %692 = vst.msk [vmem:[%s269] sm:$0xff] %vm448, %v585
        %693 = vst.msk [vmem:[%s269 + $0x8] sm:$0xff] %vm448, %v586
        %694 = vst.msk [vmem:[%s269 + $0x10] sm:$0xff] %vm448, %v587
        %695 = vst.msk [vmem:[%s269 + $0x18] sm:$0xff] %vm448, %v588
        %s696 = sand.u32 %s156, 1
        %s697 = scalar_lea.sflag [#allocation3], %s696
        %s698 = sand.u32 %s156, 1
        %s699 = smul.addr %s698, 8
        %s700 = scalar_lea.vmem [#allocation2], %s699
        %s701 = sand.u32 %s184, 1
        %s702 = scalar_lea.sflag [#allocation5], %s701
        %s703 = sand.u32 %s184, 1
        %s704 = smul.addr %s703, 32
        %s705 = scalar_lea.vmem [#allocation4], %s704
        // Predicated region
        $region41: #{tpu_custom_call.1} parent=39 // pred_check
          %p706 = pneg %p166
        $region42: #{tpu_custom_call.1} parent=39 // pred_check_branch
          %708 = sbr.rel (%p706) target = $region44
        $region43: #{tpu_custom_call.1} parent=39 // pred_region
          %s710 = ssub.s32 128, 128
          %711 = vsyncadd %s697, %s710
          %s712 = sadd.s32 %s29, %s28
          %s713 = smul.addr %s712, 128
          %s714 = scalar_lea.hbm %s5, %s713
          %s716 = sshll.u32 %s700, 4
          %s717 = int_to_ptr.vmem [resolvable:$true] %s716
          %719 = dma.vmem_to_hbm [thread:$0]  %s717, 128, %s714, %s697
        $region44: #{tpu_custom_call.1} parent=39 // pred_fallthru
          _
        // Predicated region
        $region45: #{tpu_custom_call.1} parent=39 // pred_check
          %p720 = pneg %p194
        $region46: #{tpu_custom_call.1} parent=39 // pred_check_branch
          %722 = sbr.rel (%p720) target = $region48
        $region47: #{tpu_custom_call.1} parent=39 // pred_region
          %s724 = ssub.s32 512, 512
          %725 = vsyncadd %s702, %s724
          %s726 = smul.addr %s28, 4
          %s727 = sadd.s32 %s29, %s726
          %s728 = smul.addr %s727, 128
          %s729 = scalar_lea.hbm %s6, %s728
          %s730 = sshll.u32 %s705, 4
          %s731 = int_to_ptr.vmem [resolvable:$true] %s730
          %736 = dma.vmem_to_hbm [thread:$0]  %s731, 512, %s729, %s702, 128, 128, 8
        $region48: #{tpu_custom_call.1} parent=39 // pred_fallthru
          _
      $region40: #{tpu_custom_call.1} parent=5 // pred_fallthru
        _
      %p737 = scmp.le.s32.totalorder 2, %s19
      // Predicated region
      $region49: #{tpu_custom_call.1} parent=5 // pred_check
        %p738 = pneg %p737
      $region50: #{tpu_custom_call.1} parent=5 // pred_check_branch
        %740 = sbr.rel (%p738) target = $region52
      $region51: #{tpu_custom_call.1} parent=5 // pred_region
        %s741 = ssub.s32 %s19, 2
        // Predicated region
        $region53: #{tpu_custom_call.1} parent=51 // pred_check
          %p742 = pneg %p172
        $region54: #{tpu_custom_call.1} parent=51 // pred_check_branch
          %744 = sbr.rel (%p742) target = $region56
        $region55: #{tpu_custom_call.1} parent=51 // pred_region
          %s745 = sand.u32 %s157, 1
          %s746 = scalar_lea.sflag [#allocation3], %s745
          %s747 = sand.u32 %s157, 1
          %s748 = smul.addr %s747, 8
          %s749 = scalar_lea.vmem [#allocation2], %s748
          %750 = dma.done %s746, 128
        $region56: #{tpu_custom_call.1} parent=51 // pred_fallthru
          _
        // Predicated region
        $region57: #{tpu_custom_call.1} parent=51 // pred_check
          %p751 = pneg %p200
        $region58: #{tpu_custom_call.1} parent=51 // pred_check_branch
          %753 = sbr.rel (%p751) target = $region60
        $region59: #{tpu_custom_call.1} parent=51 // pred_region
          %s754 = sand.u32 %s185, 1
          %s755 = scalar_lea.sflag [#allocation5], %s754
          %s756 = sand.u32 %s185, 1
          %s757 = smul.addr %s756, 32
          %s758 = scalar_lea.vmem [#allocation4], %s757
          %759 = dma.done %s755, 512
        $region60: #{tpu_custom_call.1} parent=51 // pred_fallthru
          _
      $region52: #{tpu_custom_call.1} parent=5 // pred_fallthru
        _
    $region6: #{tpu_custom_call.1} parent=1 // loop_footer
      %s23 = sadd.s32 1, %s19
    $region7: #{tpu_custom_call.1} parent=1 // loop_footer_branch
      %18 = sbr.rel target = $region3
    $region8: #{tpu_custom_call.1} parent=1 // loop_exit
      _
    %760 = vsyncpa [#allocation3], 1
    %s761 = scalar_lea.sflag [#allocation3], 1
    %762 = vsyncpa %s761, 1
    %763 = vsyncpa [#allocation5], 1
    %s764 = scalar_lea.sflag [#allocation5], 1
    %765 = vsyncpa %s764, 1

</llo_original>
